<compile_context>
chip_gen: v7x
topology: tpu7x:2x2x1
jax: 0.10.0
libtpu: 0.0.40
codegen_flags: <defaults>
</compile_context>

<pallas_src>
import functools

import jax
import jax.numpy as jnp
from jax.experimental import pallas as pl
from jax.experimental.pallas import tpu as pltpu


def _round_up(x: int, m: int) -> int:
    return (x + m - 1) // m * m


def _maxout_kernel(x_ref, w_ref, b_ref, o_ref):
    # x_ref: (tm, Kp)        batch tile, full (padded) contraction dim
    # w_ref: (Kp, P*tn)      all P pool slices of this out_dim tile, fused
    # b_ref: (1,  P*tn)      matching fused bias slices (f32)
    # o_ref: (tm, tn)        lane-dense output tile (tn multiple of 128)
    tn = o_ref.shape[-1]
    P = w_ref.shape[-1] // tn
    # Single wide matmul (fills the 256-wide MXU on v6e/v7x), f32 accumulation.
    y = jnp.dot(x_ref[...], w_ref[...], preferred_element_type=jnp.float32)
    y = y + b_ref[...]
    # Pool-max over vreg-aligned 128-lane slabs (static, small unrolled loop).
    acc = y[:, 0:tn]
    for p in range(1, P):
        acc = jnp.maximum(acc, y[:, p * tn:(p + 1) * tn])
    o_ref[...] = acc.astype(o_ref.dtype)


def pack_maxout_params(weight, bias, out_dim, pool_size, *, tn=128,
                       weight_dtype=jnp.float32):
    """One-time pre-pack of torch-layout Linear params into the fused layout.

    weight: (K, out_dim*pool_size); column j corresponds to
            (o = j // pool_size, p = j % pool_size), i.e. the layout implied
            by torch's .view(-1, out_dim, pool_size).
    bias:   (out_dim*pool_size,)

    Returns:
      w_packed: (Kp, nN*P*tn) where nN = ceil(out_dim/tn); for out_dim tile j,
                columns [j*P*tn, (j+1)*P*tn) hold the P pool slices back to
                back (each tn wide), dtype = weight_dtype.
      b_packed: (1, nN*P*tn), float32.

    Zero padding of K / out_dim never perturbs the result: padded K rows add 0
    to the dot and padded out_dim columns evaluate to max_p(0)=0 and are
    sliced away after the kernel.
    """
    K = weight.shape[0]
    N, P = out_dim, pool_size
    sub = 16 if weight_dtype == jnp.bfloat16 else 8
    Kp = _round_up(K, sub)
    Np = _round_up(N, tn)
    nN = Np // tn

    w = weight.reshape(K, N, P)                               # (K, N, P)
    w = jnp.pad(w, ((0, Kp - K), (0, Np - N), (0, 0)))        # (Kp, Np, P)
    w = w.reshape(Kp, nN, tn, P).transpose(0, 1, 3, 2)        # (Kp, nN, P, tn)
    w = w.reshape(Kp, nN * P * tn).astype(weight_dtype)

    b = bias.reshape(N, P)
    b = jnp.pad(b, ((0, Np - N), (0, 0)))                     # (Np, P)
    b = b.reshape(nN, tn, P).transpose(0, 2, 1)               # (nN, P, tn)
    b = b.reshape(1, nN * P * tn).astype(jnp.float32)
    return w, b


@functools.partial(jax.jit, static_argnames=("out_dim", "pool_size"))
def maxout_forward(x, w_packed, b_packed, out_dim, pool_size):
    """x: (B, input_dim); w_packed/b_packed from pack_maxout_params."""
    B, K = x.shape
    Kp, n_cols = w_packed.shape
    tn = 128
    P = pool_size
    Np = n_cols // P
    n_n = Np // tn

    w_dtype = w_packed.dtype
    sub = 16 if w_dtype == jnp.bfloat16 else 8
    # Larger batch tiles are cheap now that the weight block is inner-loop
    # resident; 256 amortizes per-step overhead without stressing VMEM.
    tm = min(256, _round_up(B, sub))
    Mp = _round_up(B, tm)
    n_m = Mp // tm

    # Cast to the compute dtype (bf16 path halves activation HBM bytes) and
    # pad only when needed (skipped entirely on the aligned path).
    xp = x if x.dtype == w_dtype else x.astype(w_dtype)
    if Mp != B or Kp != K:
        xp = jnp.pad(xp, ((0, Mp - B), (0, Kp - K)))

    # Grid ordering:
    #  * n_n >= 2: batch innermost -> weight block index constant over the
    #    inner loop, Pallas skips its DMA (weight fetched once per N tile).
    #  * n_n == 1: weight is globally invariant anyway; put batch outermost so
    #    the parallel axis has >1 tile (keeps both v7x TensorCores busy).
    if n_n >= 2:
        grid = (n_n, n_m)
        in_specs = [
            pl.BlockSpec((tm, Kp), lambda j, i: (i, 0)),        # x batch tile
            pl.BlockSpec((Kp, P * tn), lambda j, i: (0, j)),    # fused weights
            pl.BlockSpec((1, P * tn), lambda j, i: (0, j)),     # fused bias
        ]
        out_spec = pl.BlockSpec((tm, tn), lambda j, i: (i, j))
    else:
        grid = (n_m, n_n)
        in_specs = [
            pl.BlockSpec((tm, Kp), lambda i, j: (i, 0)),
            pl.BlockSpec((Kp, P * tn), lambda i, j: (0, j)),
            pl.BlockSpec((1, P * tn), lambda i, j: (0, j)),
        ]
        out_spec = pl.BlockSpec((tm, tn), lambda i, j: (i, j))

    # Generation-aware VMEM budget: double-buffered inputs + outputs, clamped
    # to ~90% of this chip's physical VMEM (128 MiB on v5e/v6e, 64 MiB on v7x).
    itemsize = jnp.dtype(w_dtype).itemsize
    vmem_bytes = 2 * (tm * Kp * itemsize          # x tiles
                      + Kp * P * tn * itemsize    # weight tiles
                      + P * tn * 4                # bias tiles
                      + tm * tn * 4)              # output tiles
    try:
        vmem_cap = int(pltpu.get_tpu_info().vmem_capacity_bytes)
    except Exception:
        vmem_cap = 64 << 20
    vmem_limit = int(min(max(vmem_bytes + (4 << 20), 16 << 20),
                         (vmem_cap * 9) // 10))

    out_padded = pl.pallas_call(
        _maxout_kernel,
        out_shape=jax.ShapeDtypeStruct((Mp, Np), jnp.float32),
        grid_spec=pltpu.PrefetchScalarGridSpec(
            num_scalar_prefetch=0,
            grid=grid,
            in_specs=in_specs,
            out_specs=out_spec,
        ),
        compiler_params=pltpu.CompilerParams(
            dimension_semantics=("parallel", "parallel"),
            vmem_limit_bytes=vmem_limit,
        ),
    )(xp, w_packed, b_packed)

    if Mp == B and Np == out_dim:
        return out_padded
    return out_padded[:B, :out_dim]


def _reference(x, weight, bias, out_dim, pool_size):
    return (x @ weight + bias).reshape(-1, out_dim, pool_size).max(axis=2)


def _run_case(key, B, input_dim, out_dim, pool_size, weight_dtype, atol, rtol):
    kx, kw, kb = jax.random.split(key, 3)
    x = jax.random.normal(kx, (B, input_dim), dtype=jnp.float32)
    # torch Linear stores (out*pool, in); we hold the transposed (in, out*pool).
    weight = jax.random.normal(kw, (input_dim, out_dim * pool_size),
                               dtype=jnp.float32) * 0.1
    bias = jax.random.normal(kb, (out_dim * pool_size,), dtype=jnp.float32) * 0.1

    # One-time parameter packing (done at model load in a real decoder).
    w_p, b_p = pack_maxout_params(weight, bias, out_dim, pool_size,
                                  weight_dtype=weight_dtype)
    w_p, b_p = jax.block_until_ready((w_p, b_p))

    out = maxout_forward(x, w_p, b_p, out_dim=out_dim, pool_size=pool_size)
    out = jax.block_until_ready(out)

    ref = _reference(x, weight, bias, out_dim, pool_size)
    assert out.shape == (B, out_dim), (out.shape, (B, out_dim))
    assert jnp.allclose(out, ref, atol=atol, rtol=rtol), (
        f"mismatch: max abs err {jnp.max(jnp.abs(out - ref))}")


if __name__ == "__main__":
    key = jax.random.PRNGKey(0)
    k1, k2, k3, k4 = jax.random.split(key, 4)

    # 1) Original decoder-sized config, exact f32 path.
    _run_case(k1, B=8, input_dim=32, out_dim=16, pool_size=4,
              weight_dtype=jnp.float32, atol=1e-5, rtol=1e-5)

    # 2) Non-default pool size / unaligned out_dim and K (locks in packing layout).
    _run_case(k2, B=5, input_dim=50, out_dim=20, pool_size=3,
              weight_dtype=jnp.float32, atol=1e-5, rtol=1e-5)

    # 3) Multiple out_dim tiles -> exercises the weight-stationary grid ordering.
    _run_case(k3, B=40, input_dim=48, out_dim=200, pool_size=2,
              weight_dtype=jnp.float32, atol=1e-5, rtol=1e-5)

    # 4) bf16 weights/activations (f32 accumulation), looser tolerance.
    _run_case(k4, B=8, input_dim=32, out_dim=16, pool_size=4,
              weight_dtype=jnp.bfloat16, atol=3e-2, rtol=3e-2)

    print("KERNEL_OK")
</pallas_src>

<mosaic_0001>
module attributes {stable_mosaic.version = 11 : i64} {
  func.func @_maxout_kernel(%arg0: i32, %arg1: i32, %arg2: memref<8x32xf32, #tpu.memory_space<vmem>>, %arg3: memref<32x512xf32, #tpu.memory_space<vmem>>, %arg4: memref<1x512xf32, #tpu.memory_space<vmem>>, %arg5: memref<8x128xf32, #tpu.memory_space<vmem>>) attributes {dimension_semantics = [#tpu.dimension_semantics<parallel>, #tpu.dimension_semantics<parallel>], iteration_bounds = array<i64: 1, 1>, scalar_prefetch = 0 : i64, scratch_operands = 0 : i64, tpu.core_type = #tpu.core_type<tc>, window_params = [{transform_indices = @transform_0, window_bounds = array<i64: 8, 32>}, {transform_indices = @transform_1, window_bounds = array<i64: 32, 512>}, {transform_indices = @transform_2, window_bounds = array<i64: 1, 512>}, {transform_indices = @transform_3, window_bounds = array<i64: 8, 128>}]} {
    %c0 = arith.constant 0 : index
    %c0_0 = arith.constant 0 : index
    %0 = vector.load %arg2[%c0, %c0_0] : memref<8x32xf32, #tpu.memory_space<vmem>>, vector<8x32xf32>
    %c0_1 = arith.constant 0 : index
    %c0_2 = arith.constant 0 : index
    %1 = vector.load %arg3[%c0_1, %c0_2] : memref<32x512xf32, #tpu.memory_space<vmem>>, vector<32x512xf32>
    %cst = arith.constant dense<0.000000e+00> : vector<8x512xf32>
    %2 = tpu.matmul %0, %1, %cst {dimension_numbers = #tpu.dot_dimension_numbers<[1], [0], [0], [1], [0, 0, 1, 1], [], []>} : vector<8x32xf32>, vector<32x512xf32>, vector<8x512xf32> -> vector<8x512xf32>
    %c0_3 = arith.constant 0 : index
    %c0_4 = arith.constant 0 : index
    %3 = vector.load %arg4[%c0_3, %c0_4] : memref<1x512xf32, #tpu.memory_space<vmem>>, vector<1x512xf32>
    %4 = vector.broadcast %3 : vector<1x512xf32> to vector<8x512xf32>
    %5 = arith.addf %2, %4 : vector<8x512xf32>
    %6 = vector.extract_strided_slice %5 {offsets = [0, 0], sizes = [8, 128], strides = [1, 1]} : vector<8x512xf32> to vector<8x128xf32>
    %7 = vector.extract_strided_slice %5 {offsets = [0, 128], sizes = [8, 128], strides = [1, 1]} : vector<8x512xf32> to vector<8x128xf32>
    %8 = arith.maximumf %6, %7 : vector<8x128xf32>
    %9 = vector.extract_strided_slice %5 {offsets = [0, 256], sizes = [8, 128], strides = [1, 1]} : vector<8x512xf32> to vector<8x128xf32>
    %10 = arith.maximumf %8, %9 : vector<8x128xf32>
    %11 = vector.extract_strided_slice %5 {offsets = [0, 384], sizes = [8, 128], strides = [1, 1]} : vector<8x512xf32> to vector<8x128xf32>
    %12 = arith.maximumf %10, %11 : vector<8x128xf32>
    %c0_5 = arith.constant 0 : index
    %c0_6 = arith.constant 0 : index
    %13 = vector.load %arg5[%c0_5, %c0_6] : memref<8x128xf32, #tpu.memory_space<vmem>>, vector<8x128xf32>
    tpu.vector_store %arg5[%c0_5, %c0_6], %12 {strides = array<i32>} : memref<8x128xf32, #tpu.memory_space<vmem>>, vector<8x128xf32>,
    return
  }
  func.func @transform_0(%arg0: i32, %arg1: i32) -> (i32, i32) {
    %c0_i32 = arith.constant 0 : i32
    %c0_i32_0 = arith.constant 0 : i32
    return %arg0, %c0_i32 : i32, i32
  }
  func.func @transform_1(%arg0: i32, %arg1: i32) -> (i32, i32) {
    %c0_i32 = arith.constant 0 : i32
    %c0_i32_0 = arith.constant 0 : i32
    return %c0_i32, %arg1 : i32, i32
  }
  func.func @transform_2(%arg0: i32, %arg1: i32) -> (i32, i32) {
    %c0_i32 = arith.constant 0 : i32
    %c0_i32_0 = arith.constant 0 : i32
    return %c0_i32, %arg1 : i32, i32
  }
  func.func @transform_3(%arg0: i32, %arg1: i32) -> (i32, i32) {
    %c0_i32 = arith.constant 0 : i32
    return %arg0, %arg1 : i32, i32
  }
}

</mosaic_0001>

<llo_original>
// kernel: maxout_forward.1
$region0: #{maxout_forward.1}
  #allocation0 [shape = 'u32[]', space=smem, size = 0x4, offset = 0x4, fixed_abs, tag = 'smem constant byte address 0x4 - core index']
  #allocation1 [shape = 'u32[144,128]{1,0:T(1,128)}', space=vmem, size = 0x12000, scoped, tag = 'internal scratch']
  %s0 = inlined_call_operand.hbm [shape: f32[8,32], index: 0, kind: input, shape index: {}]
  %s1 = inlined_call_operand.hbm [shape: f32[32,512], index: 1, kind: input, shape index: {}]
  %s2 = inlined_call_operand.vmem [shape: f32[1,512], index: 2, kind: input, shape index: {}]
  %s3 = inlined_call_operand.hbm [shape: f32[8,128], index: 3, kind: output, shape index: {}]
  %s4 = sld [smem:[#allocation0]]
  $region30: #{maxout_forward.1} parent=0
    _
  %s6 = ssub.s32 1, %s4
  %s7 = scalar_select 0, %s6, %s4
  $region1: #{maxout_forward.1} parent=0
    #allocation2 [shape = 'u8[4096]{0}', space=vmem, size = 0x1000, scoped, tag = 'input window, operand 0, single buffered']
    #allocation3 [shape = 's32[1]{0}', space=sflag, size = 0x4, scoped, tag = 'scoped memory for maxout_forward.1']
    #allocation4 [shape = 's32[1]{0}', space=sflag, size = 0x4, scoped, tag = 'scoped memory for maxout_forward.1']
    #allocation5 [shape = 'u8[65536]{0}', space=vmem, size = 0x10000, scoped, tag = 'input window, operand 1, single buffered']
    #allocation6 [shape = 's32[1]{0}', space=sflag, size = 0x4, scoped, tag = 'scoped memory for maxout_forward.1']
    #allocation7 [shape = 'u8[4096]{0}', space=vmem, size = 0x1000, scoped, tag = 'output window, operand 0, single buffered']
    %8 = vsyncpa [#allocation3], 0
    %9 = vsyncpa [#allocation6], 0
    %10 = vsyncpa [#allocation4], 0
    // Predicated region
    $region2: #{maxout_forward.1} parent=1 // pred_check
      _
    $region3: #{maxout_forward.1} parent=1 // pred_check_branch
      %12 = sbr.rel (0) target = $region5
    $region4: #{maxout_forward.1} parent=1 // pred_region
      %s14 = ssub.s32 128, 128
      %15 = vsyncadd [#allocation3], %s14
      %s17 = sshll.u32 [#allocation2], 4
      %s18 = int_to_ptr.vmem [resolvable:$true] %s17
      %20 = dma.hbm_to_vmem [thread:$0]  %s0, 128, %s18, [#allocation3]
    $region5: #{maxout_forward.1} parent=1 // pred_fallthru
      _
    // Predicated region
    $region6: #{maxout_forward.1} parent=1 // pred_check
      _
    $region7: #{maxout_forward.1} parent=1 // pred_check_branch
      %22 = sbr.rel (0) target = $region9
    $region8: #{maxout_forward.1} parent=1 // pred_region
      %s24 = ssub.s32 2048, 2048
      %25 = vsyncadd [#allocation6], %s24
      %s26 = sshll.u32 [#allocation5], 4
      %s27 = int_to_ptr.vmem [resolvable:$true] %s26
      %32 = dma.hbm_to_vmem [thread:$0]  %s1, 2048, %s27, [#allocation6], 512, 512, 32
    $region9: #{maxout_forward.1} parent=1 // pred_fallthru
      _
    // Predicated region
    $region10: #{maxout_forward.1} parent=1 // pred_check
      _
    $region11: #{maxout_forward.1} parent=1 // pred_check_branch
      %34 = sbr.rel (0) target = $region13
    $region12: #{maxout_forward.1} parent=1 // pred_region
      _
    $region13: #{maxout_forward.1} parent=1 // pred_fallthru
      _
    // Predicated region
    $region14: #{maxout_forward.1} parent=1 // pred_check
      _
    $region15: #{maxout_forward.1} parent=1 // pred_check_branch
      %36 = sbr.rel (0) target = $region17
    $region16: #{maxout_forward.1} parent=1 // pred_region
      %37 = dma.done [#allocation3], 128
    $region17: #{maxout_forward.1} parent=1 // pred_fallthru
      _
    // Predicated region
    $region18: #{maxout_forward.1} parent=1 // pred_check
      _
    $region19: #{maxout_forward.1} parent=1 // pred_check_branch
      %39 = sbr.rel (0) target = $region21
    $region20: #{maxout_forward.1} parent=1 // pred_region
      %40 = dma.done [#allocation6], 2048
    $region21: #{maxout_forward.1} parent=1 // pred_fallthru
      _
    %v41 = vld [vmem:[#allocation2] sm:$0xff]
    %v42 = vld [vmem:[#allocation5] sm:$0xff]
    %v43 = vld [vmem:[#allocation5 + $0x8] sm:$0xff]
    %v44 = vld [vmem:[#allocation5 + $0x10] sm:$0xff]
    %v45 = vld [vmem:[#allocation5 + $0x18] sm:$0xff]
    %v46 = vld [vmem:[#allocation5 + $0x20] sm:$0xff]
    %v47 = vld [vmem:[#allocation5 + $0x28] sm:$0xff]
    %v48 = vld [vmem:[#allocation5 + $0x30] sm:$0xff]
    %v49 = vld [vmem:[#allocation5 + $0x38] sm:$0xff]
    %v50 = vld [vmem:[#allocation5 + $0x40] sm:$0xff]
    %v51 = vld [vmem:[#allocation5 + $0x48] sm:$0xff]
    %v52 = vld [vmem:[#allocation5 + $0x50] sm:$0xff]
    %v53 = vld [vmem:[#allocation5 + $0x58] sm:$0xff]
    %v54 = vld [vmem:[#allocation5 + $0x60] sm:$0xff]
    %v55 = vld [vmem:[#allocation5 + $0x68] sm:$0xff]
    %v56 = vld [vmem:[#allocation5 + $0x70] sm:$0xff]
    %v57 = vld [vmem:[#allocation5 + $0x78] sm:$0xff]
    %v58 = vld [vmem:[%s2] sm:$0xf]
    %v60 = vlaneseq
    %v61 = vshrl.u32 %v60, 7
    %v62 = vsub.s32 0, %v61
    %v63 = vrot.slane %v58, %v62
    %v64 = vlaneseq
    %v65 = vshrl.u32 %v64, 7
    %v66 = vsub.s32 1, %v65
    %v67 = vrot.slane %v58, %v66
    %v68 = vlaneseq
    %v69 = vshrl.u32 %v68, 7
    %v70 = vsub.s32 2, %v69
    %v71 = vrot.slane %v58, %v70
    %v72 = vlaneseq
    %v73 = vshrl.u32 %v72, 7
    %v74 = vsub.s32 3, %v73
    %v75 = vrot.slane %v58, %v74
    %vm80 = vcmask 261120
    %v82 = vsel %vm80, %v41, 0
    %84 = vmatprep.subr.mxu0 %v43
    %85 = vmatpush1.msra.mxu0 %v42
    %86 = vmatprep.subr.mxu0 %v47
    %87 = vmatpush1.msra.mxu0 %v46
    %88 = vmatprep.subr.mxu0 %v51
    %89 = vmatpush1.msra.mxu0 %v50
    %90 = vmatprep.subr.mxu0 %v55
    %91 = vmatpush1.msra.mxu0 %v54
    %92 = vmatprep.subr.mxu0 0.0
    %93 = vmatpush1.msra.mxu0 0.0
    %94 = vmatprep.subr.mxu0 0.0
    %95 = vmatpush1.msra.mxu0 0.0
    %96 = vmatprep.subr.mxu0 0.0
    %97 = vmatpush1.msra.mxu0 0.0
    %98 = vmatprep.subr.mxu0 0.0
    %99 = vmatpush1.msra.mxu0 0.0
    %100 = vmatprep.subr.mxu0 0.0
    %101 = vmatpush1.msra.mxu0 0.0
    %102 = vmatprep.subr.mxu0 0.0
    %103 = vmatpush1.msra.mxu0 0.0
    %104 = vmatprep.subr.mxu0 0.0
    %105 = vmatpush1.msra.mxu0 0.0
    %106 = vmatprep.subr.mxu0 0.0
    %107 = vmatpush1.msra.mxu0 0.0
    %108 = vmatprep.subr.mxu0 0.0
    %109 = vmatpush1.msra.mxu0 0.0
    %110 = vmatprep.subr.mxu0 0.0
    %111 = vmatpush1.msra.mxu0 0.0
    %112 = vmatprep.subr.mxu0 0.0
    %113 = vmatpush1.msra.mxu0 0.0
    %114 = vmatprep.subr.mxu0 0.0
    %115 = vmatpush1.msra.mxu0 0.0
    %116 = vmatprep.subr.mxu0 0.0
    %117 = vmatpush1.msra.mxu0 0.0
    %118 = vmatprep.subr.mxu0 0.0
    %119 = vmatpush1.msra.mxu0 0.0
    %120 = vmatprep.subr.mxu0 0.0
    %121 = vmatpush1.msra.mxu0 0.0
    %122 = vmatprep.subr.mxu0 0.0
    %123 = vmatpush1.msra.mxu0 0.0
    %124 = vmatprep.subr.mxu0 0.0
    %125 = vmatpush1.msra.mxu0 0.0
    %126 = vmatprep.subr.mxu0 0.0
    %127 = vmatpush1.msra.mxu0 0.0
    %128 = vmatprep.subr.mxu0 0.0
    %129 = vmatpush1.msra.mxu0 0.0
    %130 = vmatprep.subr.mxu0 0.0
    %131 = vmatpush1.msra.mxu0 0.0
    %132 = vmatprep.subr.mxu0 0.0
    %133 = vmatpush1.msra.mxu0 0.0
    %134 = vmatprep.subr.mxu0 0.0
    %135 = vmatpush1.msra.mxu0 0.0
    %136 = vmatprep.subr.mxu0 0.0
    %137 = vmatpush1.msra.mxu0 0.0
    %138 = vmatprep.subr.mxu0 0.0
    %139 = vmatpush1.msra.mxu0 0.0
    %140 = vmatprep.subr.mxu0 0.0
    %141 = vmatpush1.msra.mxu0 0.0
    %142 = vmatprep.subr.mxu0 0.0
    %143 = vmatpush1.msra.mxu0 0.0
    %144 = vmatprep.subr.mxu0 0.0
    %145 = vmatpush1.msra.mxu0 0.0
    %146 = vmatprep.subr.mxu0 0.0
    %147 = vmatpush1.msra.mxu0 0.0
    %148 = vmatprep.mubr.f32.mxu0 0.0
    %149 = vmatmul.mubr.f32.gmra.mrb[0].mxu0 %v82
    %v150 = vpop.f32.mrb[0].mxu0
    %v151 = vadd.f32 %v63, %v150
    %v152 = vpop.f32.mrb[0].mxu0
    %v153 = vadd.f32 %v67, %v152
    %154 = vdwg.mxu0
    %155 = vmatprep.subr.mxu0 %v45
    %156 = vmatpush1.msra.mxu0 %v44
    %157 = vmatprep.subr.mxu0 %v49
    %158 = vmatpush1.msra.mxu0 %v48
    %159 = vmatprep.subr.mxu0 %v53
    %160 = vmatpush1.msra.mxu0 %v52
    %161 = vmatprep.subr.mxu0 %v57
    %162 = vmatpush1.msra.mxu0 %v56
    %163 = vmatprep.subr.mxu0 0.0
    %164 = vmatpush1.msra.mxu0 0.0
    %165 = vmatprep.subr.mxu0 0.0
    %166 = vmatpush1.msra.mxu0 0.0
    %167 = vmatprep.subr.mxu0 0.0
    %168 = vmatpush1.msra.mxu0 0.0
    %169 = vmatprep.subr.mxu0 0.0
    %170 = vmatpush1.msra.mxu0 0.0
    %171 = vmatprep.subr.mxu0 0.0
    %172 = vmatpush1.msra.mxu0 0.0
    %173 = vmatprep.subr.mxu0 0.0
    %174 = vmatpush1.msra.mxu0 0.0
    %175 = vmatprep.subr.mxu0 0.0
    %176 = vmatpush1.msra.mxu0 0.0
    %177 = vmatprep.subr.mxu0 0.0
    %178 = vmatpush1.msra.mxu0 0.0
    %179 = vmatprep.subr.mxu0 0.0
    %180 = vmatpush1.msra.mxu0 0.0
    %181 = vmatprep.subr.mxu0 0.0
    %182 = vmatpush1.msra.mxu0 0.0
    %183 = vmatprep.subr.mxu0 0.0
    %184 = vmatpush1.msra.mxu0 0.0
    %185 = vmatprep.subr.mxu0 0.0
    %186 = vmatpush1.msra.mxu0 0.0
    %187 = vmatprep.subr.mxu0 0.0
    %188 = vmatpush1.msra.mxu0 0.0
    %189 = vmatprep.subr.mxu0 0.0
    %190 = vmatpush1.msra.mxu0 0.0
    %191 = vmatprep.subr.mxu0 0.0
    %192 = vmatpush1.msra.mxu0 0.0
    %193 = vmatprep.subr.mxu0 0.0
    %194 = vmatpush1.msra.mxu0 0.0
    %195 = vmatprep.subr.mxu0 0.0
    %196 = vmatpush1.msra.mxu0 0.0
    %197 = vmatprep.subr.mxu0 0.0
    %198 = vmatpush1.msra.mxu0 0.0
    %199 = vmatprep.subr.mxu0 0.0
    %200 = vmatpush1.msra.mxu0 0.0
    %201 = vmatprep.subr.mxu0 0.0
    %202 = vmatpush1.msra.mxu0 0.0
    %203 = vmatprep.subr.mxu0 0.0
    %204 = vmatpush1.msra.mxu0 0.0
    %205 = vmatprep.subr.mxu0 0.0
    %206 = vmatpush1.msra.mxu0 0.0
    %207 = vmatprep.subr.mxu0 0.0
    %208 = vmatpush1.msra.mxu0 0.0
    %209 = vmatprep.subr.mxu0 0.0
    %210 = vmatpush1.msra.mxu0 0.0
    %211 = vmatprep.subr.mxu0 0.0
    %212 = vmatpush1.msra.mxu0 0.0
    %213 = vmatprep.subr.mxu0 0.0
    %214 = vmatpush1.msra.mxu0 0.0
    %215 = vmatprep.subr.mxu0 0.0
    %216 = vmatpush1.msra.mxu0 0.0
    %217 = vmatprep.subr.mxu0 0.0
    %218 = vmatpush1.msra.mxu0 0.0
    %219 = vmatprep.mubr.f32.mxu0 0.0
    %220 = vmatmul.mubr.f32.gmra.mrb[0].mxu0 %v82
    %v221 = vpop.f32.mrb[0].mxu0
    %v222 = vadd.f32 %v71, %v221
    %v223 = vpop.f32.mrb[0].mxu0
    %v224 = vadd.f32 %v75, %v223
    %225 = vdwg.mxu0
    %v226 = vmax.f32 %v151, %v153
    %v227 = vmax.f32 %v226, %v222
    %v228 = vmax.f32 %v227, %v224
    %229 = vst [vmem:[#allocation7] sm:$0xff] %v228
    // Predicated region
    $region22: #{maxout_forward.1} parent=1 // pred_check
      _
    $region23: #{maxout_forward.1} parent=1 // pred_check_branch
      %231 = sbr.rel (0) target = $region25
    $region24: #{maxout_forward.1} parent=1 // pred_region
      %s233 = ssub.s32 128, 128
      %234 = vsyncadd [#allocation4], %s233
      %s236 = sshll.u32 [#allocation7], 4
      %s237 = int_to_ptr.vmem [resolvable:$true] %s236
      %239 = dma.vmem_to_hbm [thread:$0]  %s237, 128, %s3, [#allocation4]
    $region25: #{maxout_forward.1} parent=1 // pred_fallthru
      _
    // Predicated region
    $region26: #{maxout_forward.1} parent=1 // pred_check
      _
    $region27: #{maxout_forward.1} parent=1 // pred_check_branch
      %241 = sbr.rel (0) target = $region29
    $region28: #{maxout_forward.1} parent=1 // pred_region
      %242 = dma.done [#allocation4], 128
    $region29: #{maxout_forward.1} parent=1 // pred_fallthru
      _
    %243 = vsyncpa [#allocation3], 1
    %244 = vsyncpa [#allocation6], 1
    %245 = vsyncpa [#allocation4], 1

</llo_original>
